<compile_context>
chip_gen: v7x
topology: tpu7x:2x2x1
jax: 0.10.0
libtpu: 0.0.40
codegen_flags: <defaults>
</compile_context>

<pallas_src>
import functools

import jax
import jax.numpy as jnp
from jax.experimental import pallas as pl
from jax.experimental.pallas import tpu as pltpu


def _round_up(v: int, m: int) -> int:
    return (v + m - 1) // m * m


def _vmem_limit(needed_bytes: int) -> int:
    """Generation-aware VMEM limit: exact footprint, clamped below HW capacity."""
    try:
        cap = int(pltpu.get_tpu_info().vmem_capacity_bytes)
    except Exception:
        cap = 64 * 1024 * 1024  # conservative (v7x per-TC)
    ceiling = (cap * 7) // 8    # leave headroom for compiler scratch / semaphores
    return int(min(max(needed_bytes, 16 * 1024 * 1024), ceiling))


# --------------------------------------------------------------------------
# Single-head fused MLP: (Linear -> ReLU) * (L-1) -> Linear in one kernel.
# --------------------------------------------------------------------------
def _fused_mlp_kernel(*refs, num_layers: int):
    """refs = (x_ref, w0, b0, w1, b1, ..., o_ref).

    Matmuls run in the weights' dtype (bf16 or f32) with f32 accumulation;
    bias-add / ReLU epilogue is f32; intermediate activations stay in
    VMEM/vregs and are cast back to the compute dtype only to feed the MXU.
    """
    x_ref = refs[0]
    o_ref = refs[-1]
    wb = refs[1:-1]

    h = x_ref[...]                                   # compute dtype
    for li in range(num_layers):
        w = wb[2 * li][...]
        b = wb[2 * li + 1][...].astype(jnp.float32)  # [1, out] broadcasts
        acc = jnp.dot(h, w, preferred_element_type=jnp.float32) + b
        if li < num_layers - 1:
            h = jnp.maximum(acc, 0.0).astype(w.dtype)
        else:
            h = acc
    o_ref[...] = h.astype(o_ref.dtype)


def prepare_mlp_params(params, *, compute_dtype=jnp.bfloat16):
    """One-time pad/cast of torch-style (W [in,out], b [1,out]) layer params."""
    dims = [params[0][0].shape[0]] + [w.shape[1] for (w, _) in params]
    # input (pure contraction) dim only sublane-padded; hidden/out lane-padded.
    pdims = [_round_up(dims[0], 8)] + [_round_up(d, 128) for d in dims[1:]]
    flat = []
    for li, (w, b) in enumerate(params):
        pin, pout = pdims[li], pdims[li + 1]
        wp = jnp.pad(w.astype(compute_dtype),
                     ((0, pin - w.shape[0]), (0, pout - w.shape[1])))
        bp = jnp.pad(b.reshape(1, -1).astype(jnp.float32),
                     ((0, 0), (0, pout - b.shape[-1])))
        flat += [wp, bp]
    return dict(flat=flat, dims=dims, pdims=pdims, compute_dtype=compute_dtype)


def mlp_forward(x, prepared, *, batch_tile: int = 256):
    """x: [..., Din] -> [..., Dout] using pre-padded params from prepare_mlp_params."""
    flat = prepared["flat"]
    dims = prepared["dims"]
    pdims = prepared["pdims"]
    cdt = prepared["compute_dtype"]
    num_layers = len(flat) // 2

    lead_shape = x.shape[:-1]
    din = x.shape[-1]
    assert din == dims[0], "input feature dim mismatch"
    x2 = x.reshape(-1, din)
    batch = x2.shape[0]
    out_dtype = x.dtype

    csz = jnp.dtype(cdt).itemsize
    osz = jnp.dtype(out_dtype).itemsize
    sub = 16 if csz == 2 else 8                       # dtype-aware sublane rounding
    tb = _round_up(min(batch_tile, _round_up(batch, sub)), sub)
    bpad = _round_up(batch, tb)

    xp = jnp.pad(x2.astype(cdt), ((0, bpad - batch), (0, pdims[0] - din)))
    out_pad = pdims[-1]

    in_specs = [pl.BlockSpec((tb, pdims[0]), lambda i: (i, 0))]
    for li in range(num_layers):
        pin, pout = pdims[li], pdims[li + 1]
        # Constant-index resident blocks: single-buffered (never re-fetched).
        in_specs += [
            pl.BlockSpec((pin, pout), lambda i: (0, 0),
                         pipeline_mode=pl.Buffered(1)),
            pl.BlockSpec((1, pout), lambda i: (0, 0),
                         pipeline_mode=pl.Buffered(1)),
        ]

    # Exact VMEM budget: 1x single-buffered weights + 2x io tiles + 2x f32
    # intermediate activation + slack.
    weight_bytes = sum(int(a.size) * a.dtype.itemsize for a in flat)
    io_bytes = 2 * (tb * pdims[0] * csz + tb * out_pad * osz)
    act_bytes = 2 * tb * max(pdims) * 4
    vmem_limit = _vmem_limit(weight_bytes + io_bytes + act_bytes + (2 << 20))

    out = pl.pallas_call(
        functools.partial(_fused_mlp_kernel, num_layers=num_layers),
        out_shape=jax.ShapeDtypeStruct((bpad, out_pad), out_dtype),
        grid_spec=pltpu.PrefetchScalarGridSpec(
            num_scalar_prefetch=0,
            grid=(bpad // tb,),
            in_specs=in_specs,
            out_specs=pl.BlockSpec((tb, out_pad), lambda i: (i, 0)),
        ),
        compiler_params=pltpu.CompilerParams(
            dimension_semantics=("parallel",),
            vmem_limit_bytes=vmem_limit,
        ),
    )(xp, *flat)

    # Kept for drop-in semantics; downstream consumers could take the padded
    # slab directly and slice lazily.
    out = out[:batch, : dims[-1]]
    return out.reshape(*lead_shape, dims[-1])


# --------------------------------------------------------------------------
# Multi-head fused MLP: several MLPs with identical layer structure (and
# identical dims except the final output width) sharing one input are run in
# ONE pallas_call with a leading "parallel" head grid axis (both v7x TCs).
# Used for globalfc + globalfc2.
# --------------------------------------------------------------------------
def _fused_heads_kernel(*refs, num_layers: int):
    x_ref = refs[0]
    o_ref = refs[-1]
    wb = refs[1:-1]

    h = x_ref[...]
    for li in range(num_layers):
        w = wb[2 * li][0]                             # strip head dim -> [pin, pout]
        b = wb[2 * li + 1][0].astype(jnp.float32)     # [1, pout]
        acc = jnp.dot(h, w, preferred_element_type=jnp.float32) + b
        if li < num_layers - 1:
            h = jnp.maximum(acc, 0.0).astype(w.dtype)
        else:
            h = acc
    o_ref[0] = h.astype(o_ref.dtype)


def prepare_fused_heads(heads_params, *, compute_dtype=jnp.bfloat16):
    n_heads = len(heads_params)
    num_layers = len(heads_params[0])
    dims_per_head = [[p[0][0].shape[0]] + [w.shape[1] for (w, _) in p]
                     for p in heads_params]
    for p, d in zip(heads_params, dims_per_head):
        assert len(p) == num_layers, "heads must have the same number of layers"
        assert d[:-1] == dims_per_head[0][:-1], "heads must share input/hidden dims"

    in_dims = dims_per_head[0][:-1]
    out_dims = [d[-1] for d in dims_per_head]
    pdims = ([_round_up(in_dims[0], 8)]
             + [_round_up(d, 128) for d in in_dims[1:]]
             + [_round_up(max(out_dims), 128)])

    flat = []
    for li in range(num_layers):
        pin, pout = pdims[li], pdims[li + 1]
        ws, bs = [], []
        for p in heads_params:
            w, b = p[li]
            ws.append(jnp.pad(w.astype(compute_dtype),
                              ((0, pin - w.shape[0]), (0, pout - w.shape[1]))))
            bs.append(jnp.pad(b.reshape(1, -1).astype(jnp.float32),
                              ((0, 0), (0, pout - b.shape[-1]))))
        flat += [jnp.stack(ws, 0), jnp.stack(bs, 0)]
    return dict(flat=flat, pdims=pdims, in_dim=in_dims[0], out_dims=out_dims,
                n_heads=n_heads, num_layers=num_layers, compute_dtype=compute_dtype)


def fused_heads_forward(x, prepared, *, batch_tile: int = 256):
    """x: [..., Din] -> tuple of per-head outputs [..., Dout_h]."""
    flat = prepared["flat"]
    pdims = prepared["pdims"]
    n_heads = prepared["n_heads"]
    num_layers = prepared["num_layers"]
    out_dims = prepared["out_dims"]
    cdt = prepared["compute_dtype"]

    lead_shape = x.shape[:-1]
    din = x.shape[-1]
    assert din == prepared["in_dim"], "input feature dim mismatch"
    x2 = x.reshape(-1, din)
    batch = x2.shape[0]
    out_dtype = x.dtype

    csz = jnp.dtype(cdt).itemsize
    osz = jnp.dtype(out_dtype).itemsize
    sub = 16 if csz == 2 else 8
    tb = _round_up(min(batch_tile, _round_up(batch, sub)), sub)
    bpad = _round_up(batch, tb)

    xp = jnp.pad(x2.astype(cdt), ((0, bpad - batch), (0, pdims[0] - din)))
    out_pad = pdims[-1]

    in_specs = [pl.BlockSpec((tb, pdims[0]), lambda hd, i: (i, 0))]
    for li in range(num_layers):
        pin, pout = pdims[li], pdims[li + 1]
        # Weight blocks change with the head index -> keep default (double)
        # buffering so the next head's weights prefetch behind compute.
        in_specs += [
            pl.BlockSpec((1, pin, pout), lambda hd, i: (hd, 0, 0)),
            pl.BlockSpec((1, 1, pout), lambda hd, i: (hd, 0, 0)),
        ]

    per_head_w_bytes = sum(int(a.size) * a.dtype.itemsize for a in flat) // n_heads
    io_bytes = 2 * (tb * pdims[0] * csz + tb * out_pad * osz)
    act_bytes = 2 * tb * max(pdims) * 4
    vmem_limit = _vmem_limit(2 * per_head_w_bytes + io_bytes + act_bytes + (2 << 20))

    out = pl.pallas_call(
        functools.partial(_fused_heads_kernel, num_layers=num_layers),
        out_shape=jax.ShapeDtypeStruct((n_heads, bpad, out_pad), out_dtype),
        grid_spec=pltpu.PrefetchScalarGridSpec(
            num_scalar_prefetch=0,
            grid=(n_heads, bpad // tb),
            in_specs=in_specs,
            out_specs=pl.BlockSpec((1, tb, out_pad), lambda hd, i: (hd, i, 0)),
        ),
        compiler_params=pltpu.CompilerParams(
            dimension_semantics=("parallel", "parallel"),
            vmem_limit_bytes=vmem_limit,
        ),
    )(xp, *flat)

    results = []
    for hd, dout in enumerate(out_dims):
        results.append(out[hd, :batch, :dout].reshape(*lead_shape, dout))
    return tuple(results)


# --------------------------------------------------------------------------
# Param init (torch nn.Linear default-init scale; weights stored [in, out])
# and pure-JAX references.
# --------------------------------------------------------------------------
def init_mlp_params(key, input_dim, hidden_dim, output_dim, num_layers,
                    dtype=jnp.float32):
    h = [hidden_dim] * (num_layers - 1)
    layer_dims = list(zip([input_dim] + h, h + [output_dim]))
    params = []
    for (n_in, n_out) in layer_dims:
        key, kw, kb = jax.random.split(key, 3)
        bound = 1.0 / (n_in ** 0.5)
        w = jax.random.uniform(kw, (n_in, n_out), dtype, -bound, bound)
        b = jax.random.uniform(kb, (1, n_out), dtype, -bound, bound)
        params.append((w, b))
    return params


def mlp_reference(x, params, *, compute_dtype=None):
    """Reference matching the kernel's precision policy when compute_dtype set."""
    num_layers = len(params)
    h = x.reshape(-1, x.shape[-1])
    if compute_dtype is not None:
        h = h.astype(compute_dtype)
    for i, (w, b) in enumerate(params):
        if compute_dtype is not None:
            w = w.astype(compute_dtype)
        acc = (jnp.dot(h, w, preferred_element_type=jnp.float32)
               + b.reshape(1, -1).astype(jnp.float32))
        if i < num_layers - 1:
            acc = jnp.maximum(acc, 0.0)
            h = acc.astype(compute_dtype) if compute_dtype is not None else acc
        else:
            h = acc
    out = h.astype(x.dtype)
    return out.reshape(*x.shape[:-1], params[-1][0].shape[1])


if __name__ == "__main__":
    key = jax.random.PRNGKey(0)
    bs, maxp = 1, 20

    # Stand-in for the decoder output `persel` [bs, maxp, 256].
    k_x, k_n, k_g1, k_g2, k_gk, key = jax.random.split(key, 6)
    persel = jax.random.normal(k_x, (bs, maxp, 256), jnp.float32)

    # --- globalfcnum: MLP(256, 128, 2, 2), f32 compute path (exactness) -----
    p_num = init_mlp_params(k_n, 256, 128, 2, 2)
    prep_num = prepare_mlp_params(p_num, compute_dtype=jnp.float32)
    x4o = jax.block_until_ready(mlp_forward(persel, prep_num))
    ref_num = mlp_reference(persel, p_num)
    assert x4o.shape == (bs, maxp, 2)
    assert jnp.allclose(x4o, ref_num, atol=2e-3, rtol=2e-3), \
        "globalfcnum mismatch vs reference"

    # softmax over the 2 logits, concat -> persel258 (plain JAX glue)
    x4os = jax.nn.softmax(x4o, axis=2)
    persel258 = jnp.concatenate([persel, x4os], axis=-1)

    # --- globalfc + globalfc2 fused in ONE pallas_call (head grid axis) -----
    # globalfc : MLP(258, 512, (256+1)*3 = 771, 3)
    # globalfc2: MLP(258, 512, 256*3+3+64+1 = 836, 3)
    p_gfc = init_mlp_params(k_g1, 258, 512, (256 + 1) * 3, 3)
    p_gfc2 = init_mlp_params(k_g2, 258, 512, 256 * 3 + 3 + 64 + 1, 3)
    prep_heads = prepare_fused_heads([p_gfc, p_gfc2], compute_dtype=jnp.bfloat16)
    tempkernel1, tempkernelo = fused_heads_forward(persel258, prep_heads)
    tempkernel1 = jax.block_until_ready(tempkernel1)
    tempkernelo = jax.block_until_ready(tempkernelo)
    ref_gfc = mlp_reference(persel258, p_gfc, compute_dtype=jnp.bfloat16)
    ref_gfc2 = mlp_reference(persel258, p_gfc2, compute_dtype=jnp.bfloat16)
    assert tempkernel1.shape == (bs, maxp, 771)
    assert tempkernelo.shape == (bs, maxp, 836)
    assert jnp.allclose(tempkernel1, ref_gfc, atol=5e-3, rtol=5e-3), \
        "globalfc mismatch vs matched-precision reference"
    assert jnp.allclose(tempkernelo, ref_gfc2, atol=5e-3, rtol=5e-3), \
        "globalfc2 mismatch vs matched-precision reference"

    # --- globalfck: MLP(258, 512, 128*2 = 256, 1) (single Linear), bf16 -----
    p_gfk = init_mlp_params(k_gk, 258, 512, 128 * 2, 1)
    prep_gfk = prepare_mlp_params(p_gfk, compute_dtype=jnp.bfloat16)
    tempkernel2 = jax.block_until_ready(mlp_forward(persel258, prep_gfk))
    ref_gfk = mlp_reference(persel258, p_gfk, compute_dtype=jnp.bfloat16)
    assert tempkernel2.shape == (bs, maxp, 256)
    assert jnp.allclose(tempkernel2, ref_gfk, atol=5e-3, rtol=5e-3), \
        "globalfck mismatch vs matched-precision reference"

    print("KERNEL_OK")
</pallas_src>

<mosaic_0001>
module attributes {stable_mosaic.version = 11 : i64} {
  func.func @_fused_mlp_kernel(%arg0: i32, %arg1: memref<24x256xf32, #tpu.memory_space<vmem>>, %arg2: memref<256x128xf32, #tpu.memory_space<vmem>>, %arg3: memref<1x128xf32, #tpu.memory_space<vmem>>, %arg4: memref<128x128xf32, #tpu.memory_space<vmem>>, %arg5: memref<1x128xf32, #tpu.memory_space<vmem>>, %arg6: memref<24x128xf32, #tpu.memory_space<vmem>>) attributes {dimension_semantics = [#tpu.dimension_semantics<parallel>], iteration_bounds = array<i64: 1>, scalar_prefetch = 0 : i64, scratch_operands = 0 : i64, tpu.core_type = #tpu.core_type<tc>, window_params = [{transform_indices = @transform_0, window_bounds = array<i64: 24, 256>}, {pipeline_mode = #tpu.pipeline_mode<synchronous>, transform_indices = @transform_1, window_bounds = array<i64: 256, 128>}, {pipeline_mode = #tpu.pipeline_mode<synchronous>, transform_indices = @transform_2, window_bounds = array<i64: 1, 128>}, {pipeline_mode = #tpu.pipeline_mode<synchronous>, transform_indices = @transform_3, window_bounds = array<i64: 128, 128>}, {pipeline_mode = #tpu.pipeline_mode<synchronous>, transform_indices = @transform_4, window_bounds = array<i64: 1, 128>}, {transform_indices = @transform_5, window_bounds = array<i64: 24, 128>}]} {
    %c0 = arith.constant 0 : index
    %c0_0 = arith.constant 0 : index
    %0 = vector.load %arg1[%c0, %c0_0] : memref<24x256xf32, #tpu.memory_space<vmem>>, vector<24x256xf32>
    %c0_1 = arith.constant 0 : index
    %c0_2 = arith.constant 0 : index
    %1 = vector.load %arg2[%c0_1, %c0_2] : memref<256x128xf32, #tpu.memory_space<vmem>>, vector<256x128xf32>
    %c0_3 = arith.constant 0 : index
    %c0_4 = arith.constant 0 : index
    %2 = vector.load %arg3[%c0_3, %c0_4] : memref<1x128xf32, #tpu.memory_space<vmem>>, vector<1x128xf32>
    %cst = arith.constant dense<0.000000e+00> : vector<24x128xf32>
    %3 = tpu.matmul %0, %1, %cst {dimension_numbers = #tpu.dot_dimension_numbers<[1], [0], [0], [1], [0, 0, 1, 1], [], []>} : vector<24x256xf32>, vector<256x128xf32>, vector<24x128xf32> -> vector<24x128xf32>
    %4 = vector.broadcast %2 : vector<1x128xf32> to vector<24x128xf32>
    %5 = arith.addf %3, %4 : vector<24x128xf32>
    %cst_5 = arith.constant 0.000000e+00 : f32
    %6 = vector.broadcast %cst_5 : f32 to vector<24x128xf32>
    %7 = arith.maximumf %5, %6 : vector<24x128xf32>
    %c0_6 = arith.constant 0 : index
    %c0_7 = arith.constant 0 : index
    %8 = vector.load %arg4[%c0_6, %c0_7] : memref<128x128xf32, #tpu.memory_space<vmem>>, vector<128x128xf32>
    %c0_8 = arith.constant 0 : index
    %c0_9 = arith.constant 0 : index
    %9 = vector.load %arg5[%c0_8, %c0_9] : memref<1x128xf32, #tpu.memory_space<vmem>>, vector<1x128xf32>
    %cst_10 = arith.constant dense<0.000000e+00> : vector<24x128xf32>
    %10 = tpu.matmul %7, %8, %cst_10 {dimension_numbers = #tpu.dot_dimension_numbers<[1], [0], [0], [1], [0, 0, 1, 1], [], []>} : vector<24x128xf32>, vector<128x128xf32>, vector<24x128xf32> -> vector<24x128xf32>
    %11 = vector.broadcast %9 : vector<1x128xf32> to vector<24x128xf32>
    %12 = arith.addf %10, %11 : vector<24x128xf32>
    %c0_11 = arith.constant 0 : index
    %c0_12 = arith.constant 0 : index
    %13 = vector.load %arg6[%c0_11, %c0_12] : memref<24x128xf32, #tpu.memory_space<vmem>>, vector<24x128xf32>
    tpu.vector_store %arg6[%c0_11, %c0_12], %12 {strides = array<i32>} : memref<24x128xf32, #tpu.memory_space<vmem>>, vector<24x128xf32>,
    return
  }
  func.func @transform_0(%arg0: i32) -> (i32, i32) {
    %c0_i32 = arith.constant 0 : i32
    %c0_i32_0 = arith.constant 0 : i32
    return %arg0, %c0_i32 : i32, i32
  }
  func.func @transform_1(%arg0: i32) -> (i32, i32) {
    %c0_i32 = arith.constant 0 : i32
    %c0_i32_0 = arith.constant 0 : i32
    %c0_i32_1 = arith.constant 0 : i32
    return %c0_i32, %c0_i32_0 : i32, i32
  }
  func.func @transform_2(%arg0: i32) -> (i32, i32) {
    %c0_i32 = arith.constant 0 : i32
    %c0_i32_0 = arith.constant 0 : i32
    %c0_i32_1 = arith.constant 0 : i32
    return %c0_i32, %c0_i32_0 : i32, i32
  }
  func.func @transform_3(%arg0: i32) -> (i32, i32) {
    %c0_i32 = arith.constant 0 : i32
    %c0_i32_0 = arith.constant 0 : i32
    %c0_i32_1 = arith.constant 0 : i32
    return %c0_i32, %c0_i32_0 : i32, i32
  }
  func.func @transform_4(%arg0: i32) -> (i32, i32) {
    %c0_i32 = arith.constant 0 : i32
    %c0_i32_0 = arith.constant 0 : i32
    %c0_i32_1 = arith.constant 0 : i32
    return %c0_i32, %c0_i32_0 : i32, i32
  }
  func.func @transform_5(%arg0: i32) -> (i32, i32) {
    %c0_i32 = arith.constant 0 : i32
    %c0_i32_0 = arith.constant 0 : i32
    return %arg0, %c0_i32 : i32, i32
  }
}

</mosaic_0001>

<llo_original>
// kernel: tpu_custom_call.1
$region0: #{tpu_custom_call.1}
  #allocation0 [shape = 'u32[]', space=smem, size = 0x4, offset = 0x4, fixed_abs, tag = 'smem constant byte address 0x4 - core index']
  #allocation1 [shape = 'u32[144,128]{1,0:T(1,128)}', space=vmem, size = 0x12000, scoped, tag = 'internal scratch']
  %s0 = inlined_call_operand.hbm [shape: f32[24,256], index: 0, kind: input, shape index: {}]
  %s1 = inlined_call_operand.hbm [shape: f32[256,128], index: 1, kind: input, shape index: {}]
  %s2 = inlined_call_operand.vmem [shape: f32[1,128], index: 2, kind: input, shape index: {}]
  %s3 = inlined_call_operand.hbm [shape: f32[128,128], index: 3, kind: input, shape index: {}]
  %s4 = inlined_call_operand.vmem [shape: f32[1,128], index: 4, kind: input, shape index: {}]
  %s5 = inlined_call_operand.hbm [shape: f32[24,128], index: 5, kind: output, shape index: {}]
  %s6 = sld [smem:[#allocation0]]
  $region42: #{tpu_custom_call.1} parent=0
    _
  %s8 = ssub.s32 1, %s6
  %s9 = scalar_select 0, %s8, %s6
  $region1: #{tpu_custom_call.1} parent=0
    #allocation2 [shape = 'u8[24576]{0}', space=vmem, size = 0x6000, scoped, tag = 'input window, operand 0, single buffered']
    #allocation3 [shape = 's32[1]{0}', space=sflag, size = 0x4, scoped, tag = 'scoped memory for tpu_custom_call.1']
    #allocation4 [shape = 's32[1]{0}', space=sflag, size = 0x4, scoped, tag = 'scoped memory for tpu_custom_call.1']
    #allocation5 [shape = 'u8[131072]{0}', space=vmem, size = 0x20000, scoped, tag = 'input window, operand 1, single buffered']
    #allocation6 [shape = 's32[1]{0}', space=sflag, size = 0x4, scoped, tag = 'scoped memory for tpu_custom_call.1']
    #allocation7 [shape = 'u8[65536]{0}', space=vmem, size = 0x10000, scoped, tag = 'input window, operand 3, single buffered']
    #allocation8 [shape = 'u8[12288]{0}', space=vmem, size = 0x3000, scoped, tag = 'output window, operand 0, single buffered']
    %10 = vsyncpa [#allocation3], 0
    %11 = vsyncpa [#allocation6], 0
    %12 = vsyncpa [#allocation4], 0
    // Predicated region
    $region2: #{tpu_custom_call.1} parent=1 // pred_check
      _
    $region3: #{tpu_custom_call.1} parent=1 // pred_check_branch
      %14 = sbr.rel (0) target = $region5
    $region4: #{tpu_custom_call.1} parent=1 // pred_region
      %s16 = ssub.s32 768, 768
      %17 = vsyncadd [#allocation3], %s16
      %s18 = sshll.u32 [#allocation2], 4
      %s19 = int_to_ptr.vmem [resolvable:$true] %s18
      %24 = dma.hbm_to_vmem [thread:$0]  %s0, 768, %s19, [#allocation3], 256, 256, 16
    $region5: #{tpu_custom_call.1} parent=1 // pred_fallthru
      _
    // Predicated region
    $region6: #{tpu_custom_call.1} parent=1 // pred_check
      _
    $region7: #{tpu_custom_call.1} parent=1 // pred_check_branch
      %26 = sbr.rel (0) target = $region9
    $region8: #{tpu_custom_call.1} parent=1 // pred_region
      %s28 = ssub.s32 4096, 4096
      %29 = vsyncadd [#allocation6], %s28
      %s30 = sshll.u32 [#allocation5], 4
      %s31 = int_to_ptr.vmem [resolvable:$true] %s30
      %36 = dma.hbm_to_vmem [thread:$0]  %s1, 4096, %s31, [#allocation6], 128, 128, 8
    $region9: #{tpu_custom_call.1} parent=1 // pred_fallthru
      _
    // Predicated region
    $region10: #{tpu_custom_call.1} parent=1 // pred_check
      _
    $region11: #{tpu_custom_call.1} parent=1 // pred_check_branch
      %38 = sbr.rel (0) target = $region13
    $region12: #{tpu_custom_call.1} parent=1 // pred_region
      _
    $region13: #{tpu_custom_call.1} parent=1 // pred_fallthru
      _
    // Predicated region
    $region14: #{tpu_custom_call.1} parent=1 // pred_check
      _
    $region15: #{tpu_custom_call.1} parent=1 // pred_check_branch
      %40 = sbr.rel (0) target = $region17
    $region16: #{tpu_custom_call.1} parent=1 // pred_region
      %s42 = ssub.s32 2048, 2048
      %43 = vsyncadd [#allocation6], %s42
      %s44 = sshll.u32 [#allocation7], 4
      %s45 = int_to_ptr.vmem [resolvable:$true] %s44
      %50 = dma.hbm_to_vmem [thread:$0]  %s3, 2048, %s45, [#allocation6], 128, 128, 8
    $region17: #{tpu_custom_call.1} parent=1 // pred_fallthru
      _
    // Predicated region
    $region18: #{tpu_custom_call.1} parent=1 // pred_check
      _
    $region19: #{tpu_custom_call.1} parent=1 // pred_check_branch
      %52 = sbr.rel (0) target = $region21
    $region20: #{tpu_custom_call.1} parent=1 // pred_region
      _
    $region21: #{tpu_custom_call.1} parent=1 // pred_fallthru
      _
    // Predicated region
    $region22: #{tpu_custom_call.1} parent=1 // pred_check
      _
    $region23: #{tpu_custom_call.1} parent=1 // pred_check_branch
      %54 = sbr.rel (0) target = $region25
    $region24: #{tpu_custom_call.1} parent=1 // pred_region
      %55 = dma.done [#allocation3], 768
    $region25: #{tpu_custom_call.1} parent=1 // pred_fallthru
      _
    // Predicated region
    $region26: #{tpu_custom_call.1} parent=1 // pred_check
      _
    $region27: #{tpu_custom_call.1} parent=1 // pred_check_branch
      %57 = sbr.rel (0) target = $region29
    $region28: #{tpu_custom_call.1} parent=1 // pred_region
      %58 = dma.done [#allocation6], 4096
    $region29: #{tpu_custom_call.1} parent=1 // pred_fallthru
      _
    // Predicated region
    $region30: #{tpu_custom_call.1} parent=1 // pred_check
      _
    $region31: #{tpu_custom_call.1} parent=1 // pred_check_branch
      %60 = sbr.rel (0) target = $region33
    $region32: #{tpu_custom_call.1} parent=1 // pred_region
      %61 = dma.done [#allocation6], 2048
    $region33: #{tpu_custom_call.1} parent=1 // pred_fallthru
      _
    %v62 = vld [vmem:[#allocation2] sm:$0xff]
    %v63 = vld [vmem:[#allocation2 + $0x8] sm:$0xff]
    %v64 = vld [vmem:[#allocation2 + $0x10] sm:$0xff]
    %v65 = vld [vmem:[#allocation2 + $0x18] sm:$0xff]
    %v66 = vld [vmem:[#allocation2 + $0x20] sm:$0xff]
    %v67 = vld [vmem:[#allocation2 + $0x28] sm:$0xff]
    %v68 = vld [vmem:[#allocation5] sm:$0xff]
    %v69 = vld [vmem:[#allocation5 + $0x8] sm:$0xff]
    %v70 = vld [vmem:[#allocation5 + $0x10] sm:$0xff]
    %v71 = vld [vmem:[#allocation5 + $0x18] sm:$0xff]
    %v72 = vld [vmem:[#allocation5 + $0x20] sm:$0xff]
    %v73 = vld [vmem:[#allocation5 + $0x28] sm:$0xff]
    %v74 = vld [vmem:[#allocation5 + $0x30] sm:$0xff]
    %v75 = vld [vmem:[#allocation5 + $0x38] sm:$0xff]
    %v76 = vld [vmem:[#allocation5 + $0x40] sm:$0xff]
    %v77 = vld [vmem:[#allocation5 + $0x48] sm:$0xff]
    %v78 = vld [vmem:[#allocation5 + $0x50] sm:$0xff]
    %v79 = vld [vmem:[#allocation5 + $0x58] sm:$0xff]
    %v80 = vld [vmem:[#allocation5 + $0x60] sm:$0xff]
    %v81 = vld [vmem:[#allocation5 + $0x68] sm:$0xff]
    %v82 = vld [vmem:[#allocation5 + $0x70] sm:$0xff]
    %v83 = vld [vmem:[#allocation5 + $0x78] sm:$0xff]
    %v84 = vld [vmem:[#allocation5 + $0x80] sm:$0xff]
    %v85 = vld [vmem:[#allocation5 + $0x88] sm:$0xff]
    %v86 = vld [vmem:[#allocation5 + $0x90] sm:$0xff]
    %v87 = vld [vmem:[#allocation5 + $0x98] sm:$0xff]
    %v88 = vld [vmem:[#allocation5 + $0xa0] sm:$0xff]
    %v89 = vld [vmem:[#allocation5 + $0xa8] sm:$0xff]
    %v90 = vld [vmem:[#allocation5 + $0xb0] sm:$0xff]
    %v91 = vld [vmem:[#allocation5 + $0xb8] sm:$0xff]
    %v92 = vld [vmem:[#allocation5 + $0xc0] sm:$0xff]
    %v93 = vld [vmem:[#allocation5 + $0xc8] sm:$0xff]
    %v94 = vld [vmem:[#allocation5 + $0xd0] sm:$0xff]
    %v95 = vld [vmem:[#allocation5 + $0xd8] sm:$0xff]
    %v96 = vld [vmem:[#allocation5 + $0xe0] sm:$0xff]
    %v97 = vld [vmem:[#allocation5 + $0xe8] sm:$0xff]
    %v98 = vld [vmem:[#allocation5 + $0xf0] sm:$0xff]
    %v99 = vld [vmem:[#allocation5 + $0xf8] sm:$0xff]
    %v100 = vld [vmem:[%s2] sm:$0x1]
    %v102 = vlaneseq
    %v103 = vshrl.u32 %v102, 7
    %v104 = vsub.s32 0, %v103
    %v105 = vrot.slane %v100, %v104
    %107 = vmatprep.subr.mxu0 0.0
    %108 = vmatpush1.msra.mxu0 %v68
    %109 = vmatprep.subr.mxu0 0.0
    %110 = vmatpush1.msra.mxu0 %v69
    %111 = vmatprep.subr.mxu0 0.0
    %112 = vmatpush1.msra.mxu0 %v70
    %113 = vmatprep.subr.mxu0 0.0
    %114 = vmatpush1.msra.mxu0 %v71
    %115 = vmatprep.subr.mxu0 0.0
    %116 = vmatpush1.msra.mxu0 %v72
    %117 = vmatprep.subr.mxu0 0.0
    %118 = vmatpush1.msra.mxu0 %v73
    %119 = vmatprep.subr.mxu0 0.0
    %120 = vmatpush1.msra.mxu0 %v74
    %121 = vmatprep.subr.mxu0 0.0
    %122 = vmatpush1.msra.mxu0 %v75
    %123 = vmatprep.subr.mxu0 0.0
    %124 = vmatpush1.msra.mxu0 %v76
    %125 = vmatprep.subr.mxu0 0.0
    %126 = vmatpush1.msra.mxu0 %v77
    %127 = vmatprep.subr.mxu0 0.0
    %128 = vmatpush1.msra.mxu0 %v78
    %129 = vmatprep.subr.mxu0 0.0
    %130 = vmatpush1.msra.mxu0 %v79
    %131 = vmatprep.subr.mxu0 0.0
    %132 = vmatpush1.msra.mxu0 %v80
    %133 = vmatprep.subr.mxu0 0.0
    %134 = vmatpush1.msra.mxu0 %v81
    %135 = vmatprep.subr.mxu0 0.0
    %136 = vmatpush1.msra.mxu0 %v82
    %137 = vmatprep.subr.mxu0 0.0
    %138 = vmatpush1.msra.mxu0 %v83
    %139 = vmatprep.subr.mxu0 0.0
    %140 = vmatpush1.msra.mxu0 %v84
    %141 = vmatprep.subr.mxu0 0.0
    %142 = vmatpush1.msra.mxu0 %v85
    %143 = vmatprep.subr.mxu0 0.0
    %144 = vmatpush1.msra.mxu0 %v86
    %145 = vmatprep.subr.mxu0 0.0
    %146 = vmatpush1.msra.mxu0 %v87
    %147 = vmatprep.subr.mxu0 0.0
    %148 = vmatpush1.msra.mxu0 %v88
    %149 = vmatprep.subr.mxu0 0.0
    %150 = vmatpush1.msra.mxu0 %v89
    %151 = vmatprep.subr.mxu0 0.0
    %152 = vmatpush1.msra.mxu0 %v90
    %153 = vmatprep.subr.mxu0 0.0
    %154 = vmatpush1.msra.mxu0 %v91
    %155 = vmatprep.subr.mxu0 0.0
    %156 = vmatpush1.msra.mxu0 %v92
    %157 = vmatprep.subr.mxu0 0.0
    %158 = vmatpush1.msra.mxu0 %v93
    %159 = vmatprep.subr.mxu0 0.0
    %160 = vmatpush1.msra.mxu0 %v94
    %161 = vmatprep.subr.mxu0 0.0
    %162 = vmatpush1.msra.mxu0 %v95
    %163 = vmatprep.subr.mxu0 0.0
    %164 = vmatpush1.msra.mxu0 %v96
    %165 = vmatprep.subr.mxu0 0.0
    %166 = vmatpush1.msra.mxu0 %v97
    %167 = vmatprep.subr.mxu0 0.0
    %168 = vmatpush1.msra.mxu0 %v98
    %169 = vmatprep.subr.mxu0 0.0
    %170 = vmatpush1.msra.mxu0 %v99
    %171 = vmatprep.mubr.f32.mxu0 %v63
    %172 = vmatmul.mubr.f32.gmra.mrb[0].mxu0 %v62
    %v173 = vpop.f32.mrb[0].mxu0
    %v174 = vadd.f32 %v105, %v173
    %v175 = vpop.f32.mrb[0].mxu0
    %176 = vmatprep.mubr.f32.mxu0 %v65
    %177 = vmatmul.mubr.f32.gmra.mrb[0].mxu0 %v64
    %v178 = vpop.f32.mrb[0].mxu0
    %v179 = vadd.f32 %v105, %v178
    %v180 = vpop.f32.mrb[0].mxu0
    %181 = vmatprep.mubr.f32.mxu0 %v67
    %182 = vmatmul.mubr.f32.gmra.mrb[0].mxu0 %v66
    %v183 = vpop.f32.mrb[0].mxu0
    %v184 = vadd.f32 %v105, %v183
    %v185 = vpop.f32.mrb[0].mxu0
    %186 = vdwg.mxu0
    %v187 = vmax.f32 %v174, 0.0
    %v188 = vmax.f32 %v179, 0.0
    %v189 = vmax.f32 %v184, 0.0
    %v190 = vld [vmem:[#allocation7] sm:$0xff]
    %v191 = vld [vmem:[#allocation7 + $0x8] sm:$0xff]
    %v192 = vld [vmem:[#allocation7 + $0x10] sm:$0xff]
    %v193 = vld [vmem:[#allocation7 + $0x18] sm:$0xff]
    %v194 = vld [vmem:[#allocation7 + $0x20] sm:$0xff]
    %v195 = vld [vmem:[#allocation7 + $0x28] sm:$0xff]
    %v196 = vld [vmem:[#allocation7 + $0x30] sm:$0xff]
    %v197 = vld [vmem:[#allocation7 + $0x38] sm:$0xff]
    %v198 = vld [vmem:[#allocation7 + $0x40] sm:$0xff]
    %v199 = vld [vmem:[#allocation7 + $0x48] sm:$0xff]
    %v200 = vld [vmem:[#allocation7 + $0x50] sm:$0xff]
    %v201 = vld [vmem:[#allocation7 + $0x58] sm:$0xff]
    %v202 = vld [vmem:[#allocation7 + $0x60] sm:$0xff]
    %v203 = vld [vmem:[#allocation7 + $0x68] sm:$0xff]
    %v204 = vld [vmem:[#allocation7 + $0x70] sm:$0xff]
    %v205 = vld [vmem:[#allocation7 + $0x78] sm:$0xff]
    %v206 = vld [vmem:[%s4] sm:$0x1]
    %v208 = vlaneseq
    %v209 = vshrl.u32 %v208, 7
    %v210 = vsub.s32 0, %v209
    %v211 = vrot.slane %v206, %v210
    %213 = vmatprep.subr.mxu0 0.0
    %214 = vmatpush1.msra.mxu0 %v190
    %215 = vmatprep.subr.mxu0 0.0
    %216 = vmatpush1.msra.mxu0 %v191
    %217 = vmatprep.subr.mxu0 0.0
    %218 = vmatpush1.msra.mxu0 %v192
    %219 = vmatprep.subr.mxu0 0.0
    %220 = vmatpush1.msra.mxu0 %v193
    %221 = vmatprep.subr.mxu0 0.0
    %222 = vmatpush1.msra.mxu0 %v194
    %223 = vmatprep.subr.mxu0 0.0
    %224 = vmatpush1.msra.mxu0 %v195
    %225 = vmatprep.subr.mxu0 0.0
    %226 = vmatpush1.msra.mxu0 %v196
    %227 = vmatprep.subr.mxu0 0.0
    %228 = vmatpush1.msra.mxu0 %v197
    %229 = vmatprep.subr.mxu0 0.0
    %230 = vmatpush1.msra.mxu0 %v198
    %231 = vmatprep.subr.mxu0 0.0
    %232 = vmatpush1.msra.mxu0 %v199
    %233 = vmatprep.subr.mxu0 0.0
    %234 = vmatpush1.msra.mxu0 %v200
    %235 = vmatprep.subr.mxu0 0.0
    %236 = vmatpush1.msra.mxu0 %v201
    %237 = vmatprep.subr.mxu0 0.0
    %238 = vmatpush1.msra.mxu0 %v202
    %239 = vmatprep.subr.mxu0 0.0
    %240 = vmatpush1.msra.mxu0 %v203
    %241 = vmatprep.subr.mxu0 0.0
    %242 = vmatpush1.msra.mxu0 %v204
    %243 = vmatprep.subr.mxu0 0.0
    %244 = vmatpush1.msra.mxu0 %v205
    %245 = vmatprep.subr.mxu0 0.0
    %246 = vmatpush1.msra.mxu0 0.0
    %247 = vmatprep.subr.mxu0 0.0
    %248 = vmatpush1.msra.mxu0 0.0
    %249 = vmatprep.subr.mxu0 0.0
    %250 = vmatpush1.msra.mxu0 0.0
    %251 = vmatprep.subr.mxu0 0.0
    %252 = vmatpush1.msra.mxu0 0.0
    %253 = vmatprep.subr.mxu0 0.0
    %254 = vmatpush1.msra.mxu0 0.0
    %255 = vmatprep.subr.mxu0 0.0
    %256 = vmatpush1.msra.mxu0 0.0
    %257 = vmatprep.subr.mxu0 0.0
    %258 = vmatpush1.msra.mxu0 0.0
    %259 = vmatprep.subr.mxu0 0.0
    %260 = vmatpush1.msra.mxu0 0.0
    %261 = vmatprep.subr.mxu0 0.0
    %262 = vmatpush1.msra.mxu0 0.0
    %263 = vmatprep.subr.mxu0 0.0
    %264 = vmatpush1.msra.mxu0 0.0
    %265 = vmatprep.subr.mxu0 0.0
    %266 = vmatpush1.msra.mxu0 0.0
    %267 = vmatprep.subr.mxu0 0.0
    %268 = vmatpush1.msra.mxu0 0.0
    %269 = vmatprep.subr.mxu0 0.0
    %270 = vmatpush1.msra.mxu0 0.0
    %271 = vmatprep.subr.mxu0 0.0
    %272 = vmatpush1.msra.mxu0 0.0
    %273 = vmatprep.subr.mxu0 0.0
    %274 = vmatpush1.msra.mxu0 0.0
    %275 = vmatprep.subr.mxu0 0.0
    %276 = vmatpush1.msra.mxu0 0.0
    %277 = vmatprep.mubr.f32.mxu0 0.0
    %278 = vmatmul.mubr.f32.gmra.mrb[0].mxu0 %v187
    %v279 = vpop.f32.mrb[0].mxu0
    %v280 = vadd.f32 %v211, %v279
    %v281 = vpop.f32.mrb[0].mxu0
    %282 = vmatprep.mubr.f32.mxu0 0.0
    %283 = vmatmul.mubr.f32.gmra.mrb[0].mxu0 %v188
    %v284 = vpop.f32.mrb[0].mxu0
    %v285 = vadd.f32 %v211, %v284
    %v286 = vpop.f32.mrb[0].mxu0
    %287 = vmatprep.mubr.f32.mxu0 0.0
    %288 = vmatmul.mubr.f32.gmra.mrb[0].mxu0 %v189
    %v289 = vpop.f32.mrb[0].mxu0
    %v290 = vadd.f32 %v211, %v289
    %v291 = vpop.f32.mrb[0].mxu0
    %292 = vdwg.mxu0
    %293 = vst [vmem:[#allocation8] sm:$0xff] %v280
    %294 = vst [vmem:[#allocation8 + $0x8] sm:$0xff] %v285
    %295 = vst [vmem:[#allocation8 + $0x10] sm:$0xff] %v290
    // Predicated region
    $region34: #{tpu_custom_call.1} parent=1 // pred_check
      _
    $region35: #{tpu_custom_call.1} parent=1 // pred_check_branch
      %297 = sbr.rel (0) target = $region37
    $region36: #{tpu_custom_call.1} parent=1 // pred_region
      %s299 = ssub.s32 384, 384
      %300 = vsyncadd [#allocation4], %s299
      %s301 = sshll.u32 [#allocation8], 4
      %s302 = int_to_ptr.vmem [resolvable:$true] %s301
      %307 = dma.vmem_to_hbm [thread:$0]  %s302, 384, %s5, [#allocation4], 128, 128, 8
    $region37: #{tpu_custom_call.1} parent=1 // pred_fallthru
      _
    // Predicated region
    $region38: #{tpu_custom_call.1} parent=1 // pred_check
      _
    $region39: #{tpu_custom_call.1} parent=1 // pred_check_branch
      %309 = sbr.rel (0) target = $region41
    $region40: #{tpu_custom_call.1} parent=1 // pred_region
      %310 = dma.done [#allocation4], 384
    $region41: #{tpu_custom_call.1} parent=1 // pred_fallthru
      _
    %311 = vsyncpa [#allocation3], 1
    %312 = vsyncpa [#allocation6], 1
    %313 = vsyncpa [#allocation4], 1

</llo_original>
